<compile_context>
chip_gen: v6e
topology: v6e:2x2x1
jax: 0.10.0
libtpu: 0.0.40
codegen_flags: <defaults>
</compile_context>

<pallas_src>
import jax
import jax.numpy as jnp
from jax.experimental import pallas as pl
from jax.experimental.pallas import tpu as pltpu


def _cdiv(a, b):
    return -(-a // b)


def _round_up(x, m):
    return ((x + m - 1) // m) * m


def _divisors(n):
    small, large = [], []
    d = 1
    while d * d <= n:
        if n % d == 0:
            small.append(d)
            if d != n // d:
                large.append(n // d)
        d += 1
    return small + large[::-1]


def _choose_fold(nc, hw, *, l_max=4096, r_min=16):
    """Pick S | hw so rows = nc*S and cols = hw//S are both well shaped.

    Smallest S whose width hw//S fits a full-lane block (<= l_max) and, if
    possible, also gives enough rows (>= r_min) for >=2 row tiles.  For image
    shapes S in {H, W} always exists, so L is never degenerate.
    """
    best = None
    for s in _divisors(hw):           # ascending
        l = hw // s
        if l > l_max:
            continue                  # block would be too wide
        if best is None:
            best = s                  # smallest S with a manageable width
        if nc * s >= r_min:
            return s                  # also enough rows for multiple tiles
    return best if best is not None else hw


def _vmem_capacity_bytes():
    try:
        info = pltpu.get_tpu_info()
        cap = getattr(info, "vmem_capacity_bytes", None)
        if cap:
            return int(cap)
    except Exception:
        pass
    return 64 * 1024 * 1024           # conservative (v7x-sized) fallback


def _dice_partial_kernel(x_ref, t_ref, inter_ref, denom_ref):
    # Per-sub-row partial sums.  Casts to f32 are folded into every use so the
    # compiler does not stage shared full-tile f32 temporaries; the extra vld
    # slots are free in this HBM-bound kernel.
    inter_ref[...] = jnp.sum(
        x_ref[...].astype(jnp.float32) * t_ref[...].astype(jnp.float32),
        axis=1, keepdims=True)
    denom_ref[...] = (
        jnp.sum(x_ref[...].astype(jnp.float32), axis=1, keepdims=True)
        + jnp.sum(t_ref[...].astype(jnp.float32), axis=1, keepdims=True))


def multiclass_dice_loss(inputs, targets, weights=None, *, smooth=1.0):
    N, C, H, W = targets.shape
    assert inputs.shape == targets.shape
    nc = N * C
    hw = H * W

    # ---- fold the spatial axis into sub-rows (exact reshape, no padding) ----
    S = _choose_fold(nc, hw)
    R = nc * S                 # sub-rows; each (n, c) owns S consecutive rows
    L = hw // S                # lane extent; one block spans the full width
    x2d = inputs.reshape(R, L)         # native dtype; cast happens in VMEM
    t2d = targets.reshape(R, L)
    itemsize = max(jnp.dtype(inputs.dtype).itemsize,
                   jnp.dtype(targets.dtype).itemsize)

    # ---- generation-aware VMEM budgets ----
    cap = _vmem_capacity_bytes()
    if cap >= 96 * 1024 * 1024:        # v5e / v6e: 128 MiB physical VMEM
        budget = 32 * 1024 * 1024
        vmem_limit = 64 * 1024 * 1024
    else:                              # v7x (64 MiB per TC) or unknown
        budget = 16 * 1024 * 1024
        vmem_limit = 32 * 1024 * 1024

    # Per block row: 2 inputs x 2 pipeline buffers (native dtype) plus
    # headroom for ~4 f32-tile compiler temporaries (casts / product / sums).
    per_row = L * (2 * 2 * itemsize + 4 * 4)
    max_row_tile = max(8, min(1024, (budget // per_row) // 8 * 8))
    max_row_tile = min(max_row_tile, _round_up(R, 8))

    n_tiles = _cdiv(R, max_row_tile)
    if R >= 16:
        n_tiles = max(n_tiles, 2)      # >=2 blocks on the parallel axis (v7x)
    row_tile = _round_up(_cdiv(R, n_tiles), 8)
    grid_rows = _cdiv(R, row_tile)
    r_pad = grid_rows * row_tile       # output rows (last block may overhang)

    # Safety for extremely wide L (row_tile already floored at 8).
    vmem_limit = max(vmem_limit, row_tile * per_row + 2 * 1024 * 1024)

    inter, denom = pl.pallas_call(
        _dice_partial_kernel,
        out_shape=(jax.ShapeDtypeStruct((r_pad, 1), jnp.float32),
                   jax.ShapeDtypeStruct((r_pad, 1), jnp.float32)),
        grid_spec=pltpu.PrefetchScalarGridSpec(
            num_scalar_prefetch=0,
            grid=(grid_rows,),
            in_specs=[pl.BlockSpec((row_tile, L), lambda r: (r, 0)),
                      pl.BlockSpec((row_tile, L), lambda r: (r, 0))],
            out_specs=[pl.BlockSpec((row_tile, 1), lambda r: (r, 0)),
                       pl.BlockSpec((row_tile, 1), lambda r: (r, 0))],
        ),
        compiler_params=pltpu.CompilerParams(
            dimension_semantics=("parallel",),
            vmem_limit_bytes=vmem_limit,
        ),
    )(x2d, t2d)

    # ---- combine sub-row partials BEFORE smooth/divide (exact) ----
    inter = inter[:R, 0].reshape(nc, S).sum(axis=1)
    denom = denom[:R, 0].reshape(nc, S).sum(axis=1)
    dice = 2.0 * (inter + smooth) / (denom + smooth)   # per (n, c), n-major

    if weights is None:
        w_rows = jnp.ones((nc,), jnp.float32)
    else:
        w_rows = jnp.tile(jnp.asarray(weights, jnp.float32), N)
    # total = (1/N) * sum_{n,c} w_c * (1 - dice_{n,c})  == PyTorch per-class sum
    return jnp.sum(w_rows * (1.0 - dice)) / N


def _reference(inputs, targets, weights=None, smooth=1.0):
    """Pure-JAX transcription of the PyTorch module for verification."""
    N, C = targets.shape[0], targets.shape[1]
    total = 0.0
    for i in range(C):
        xi = inputs[:, i].reshape(N, -1).astype(jnp.float32)
        ti = targets[:, i].reshape(N, -1).astype(jnp.float32)
        inter = (xi * ti).sum(axis=1)
        loss = 2.0 * (inter + smooth) / (xi.sum(axis=1) + ti.sum(axis=1) + smooth)
        loss = 1.0 - loss.sum() / N
        if weights is not None:
            loss = loss * weights[i]
        total = total + loss
    return total


if __name__ == "__main__":
    key = jax.random.PRNGKey(0)
    k1, k2, k3, k4 = jax.random.split(key, 4)

    # --- aligned small case ---
    N, C, H, W = 2, 4, 16, 16
    x = jax.nn.sigmoid(jax.random.normal(k1, (N, C, H, W), jnp.float32))
    t = (jax.random.uniform(k2, (N, C, H, W)) > 0.5).astype(jnp.float32)

    loss = jax.block_until_ready(multiclass_dice_loss(x, t))
    ref = _reference(x, t)
    assert jnp.allclose(loss, ref, rtol=1e-5, atol=1e-5), (loss, ref)

    w = jnp.array([0.5, 1.0, 2.0, 0.25], jnp.float32)
    loss_w = jax.block_until_ready(multiclass_dice_loss(x, t, w))
    ref_w = _reference(x, t, w)
    assert jnp.allclose(loss_w, ref_w, rtol=1e-5, atol=1e-5), (loss_w, ref_w)

    # --- ragged case (H*W not a multiple of 128, rows not a multiple of the
    #     row tile): exercises the pad-free edge-block path ---
    N2, C2, H2, W2 = 2, 4, 19, 21
    x2 = jax.nn.sigmoid(jax.random.normal(k3, (N2, C2, H2, W2), jnp.float32))
    t2 = (jax.random.uniform(k4, (N2, C2, H2, W2)) > 0.5).astype(jnp.float32)
    loss2 = jax.block_until_ready(multiclass_dice_loss(x2, t2, w))
    ref2 = _reference(x2, t2, w)
    assert jnp.allclose(loss2, ref2, rtol=1e-5, atol=1e-5), (loss2, ref2)

    print("KERNEL_OK")
</pallas_src>

<mosaic_0001>
module attributes {stable_mosaic.version = 11 : i64} {
  func.func @_dice_partial_kernel(%arg0: i32, %arg1: memref<8x128xf32, #tpu.memory_space<vmem>>, %arg2: memref<8x128xf32, #tpu.memory_space<vmem>>, %arg3: memref<8x1xf32, #tpu.memory_space<vmem>>, %arg4: memref<8x1xf32, #tpu.memory_space<vmem>>) attributes {dimension_semantics = [#tpu.dimension_semantics<parallel>], iteration_bounds = array<i64: 2>, scalar_prefetch = 0 : i64, scratch_operands = 0 : i64, tpu.core_type = #tpu.core_type<tc>, window_params = [{transform_indices = @transform_0, window_bounds = array<i64: 8, 128>}, {transform_indices = @transform_1, window_bounds = array<i64: 8, 128>}, {transform_indices = @transform_2, window_bounds = array<i64: 8, 1>}, {transform_indices = @transform_3, window_bounds = array<i64: 8, 1>}]} {
    %c0 = arith.constant 0 : index
    %c0_0 = arith.constant 0 : index
    %0 = vector.load %arg1[%c0, %c0_0] : memref<8x128xf32, #tpu.memory_space<vmem>>, vector<8x128xf32>
    %c0_1 = arith.constant 0 : index
    %c0_2 = arith.constant 0 : index
    %1 = vector.load %arg2[%c0_1, %c0_2] : memref<8x128xf32, #tpu.memory_space<vmem>>, vector<8x128xf32>
    %2 = arith.mulf %0, %1 : vector<8x128xf32>
    %cst = arith.constant dense<0.000000e+00> : vector<8xf32>
    %3 = vector.multi_reduction <add>, %2, %cst [1] : vector<8x128xf32> to vector<8xf32>
    %4 = vector.shape_cast %3 : vector<8xf32> to vector<8x1xf32>
    %c0_3 = arith.constant 0 : index
    %c0_4 = arith.constant 0 : index
    %5 = vector.load %arg3[%c0_3, %c0_4] : memref<8x1xf32, #tpu.memory_space<vmem>>, vector<8x1xf32>
    tpu.vector_store %arg3[%c0_3, %c0_4], %4 {strides = array<i32>} : memref<8x1xf32, #tpu.memory_space<vmem>>, vector<8x1xf32>,
    %c0_5 = arith.constant 0 : index
    %c0_6 = arith.constant 0 : index
    %6 = vector.load %arg1[%c0_5, %c0_6] : memref<8x128xf32, #tpu.memory_space<vmem>>, vector<8x128xf32>
    %cst_7 = arith.constant dense<0.000000e+00> : vector<8xf32>
    %7 = vector.multi_reduction <add>, %6, %cst_7 [1] : vector<8x128xf32> to vector<8xf32>
    %8 = vector.shape_cast %7 : vector<8xf32> to vector<8x1xf32>
    %c0_8 = arith.constant 0 : index
    %c0_9 = arith.constant 0 : index
    %9 = vector.load %arg2[%c0_8, %c0_9] : memref<8x128xf32, #tpu.memory_space<vmem>>, vector<8x128xf32>
    %cst_10 = arith.constant dense<0.000000e+00> : vector<8xf32>
    %10 = vector.multi_reduction <add>, %9, %cst_10 [1] : vector<8x128xf32> to vector<8xf32>
    %11 = vector.shape_cast %10 : vector<8xf32> to vector<8x1xf32>
    %12 = arith.addf %8, %11 : vector<8x1xf32>
    %c0_11 = arith.constant 0 : index
    %c0_12 = arith.constant 0 : index
    %13 = vector.load %arg4[%c0_11, %c0_12] : memref<8x1xf32, #tpu.memory_space<vmem>>, vector<8x1xf32>
    tpu.vector_store %arg4[%c0_11, %c0_12], %12 {strides = array<i32>} : memref<8x1xf32, #tpu.memory_space<vmem>>, vector<8x1xf32>,
    return
  }
  func.func @transform_0(%arg0: i32) -> (i32, i32) {
    %c0_i32 = arith.constant 0 : i32
    %c0_i32_0 = arith.constant 0 : i32
    return %arg0, %c0_i32 : i32, i32
  }
  func.func @transform_1(%arg0: i32) -> (i32, i32) {
    %c0_i32 = arith.constant 0 : i32
    %c0_i32_0 = arith.constant 0 : i32
    return %arg0, %c0_i32 : i32, i32
  }
  func.func @transform_2(%arg0: i32) -> (i32, i32) {
    %c0_i32 = arith.constant 0 : i32
    %c0_i32_0 = arith.constant 0 : i32
    return %arg0, %c0_i32 : i32, i32
  }
  func.func @transform_3(%arg0: i32) -> (i32, i32) {
    %c0_i32 = arith.constant 0 : i32
    %c0_i32_0 = arith.constant 0 : i32
    return %arg0, %c0_i32 : i32, i32
  }
}

</mosaic_0001>

<llo_original>
// kernel: tpu_custom_call.1
$region0: #{tpu_custom_call.1}
  #allocation0 [shape = 'u32[]', space=smem, size = 0x4, offset = 0x4, fixed_abs, tag = 'smem constant byte address 0x4 - core index']
  #allocation1 [shape = 'u32[144,128]{1,0:T(1,128)}', space=vmem, size = 0x12000, scoped, tag = 'internal scratch']
  %s0 = inlined_call_operand.hbm [shape: f32[16,128], index: 0, kind: input, shape index: {}]
  %s1 = inlined_call_operand.hbm [shape: f32[16,128], index: 1, kind: input, shape index: {}]
  %s2 = inlined_call_operand.vmem [shape: f32[16,1], index: 2, kind: output, shape index: {0}]
  %s3 = inlined_call_operand.vmem [shape: f32[16,1], index: 3, kind: output, shape index: {1}]
  %4 = xla_tuple %s2, %s3
  %s5 = sld [smem:[#allocation0]]
  $region57: #{tpu_custom_call.1} parent=0
    _
  %s7 = ssub.s32 1, %s5
  %s8 = scalar_select 0, %s7, %s5
  $region1: #{tpu_custom_call.1} parent=0
    #allocation2 [shape = 'u8[8192]{0}', space=vmem, size = 0x2000, scoped, tag = 'input window, operand 0']
    #allocation3 [shape = 's32[2]{0}', space=sflag, size = 0x8, scoped, tag = 'scoped memory for tpu_custom_call.1']
    #allocation4 [shape = 'u8[8192]{0}', space=vmem, size = 0x2000, scoped, tag = 'input window, operand 1']
    #allocation5 [shape = 's32[2]{0}', space=sflag, size = 0x8, scoped, tag = 'scoped memory for tpu_custom_call.1']
    %9 = vsyncpa [#allocation3], 0
    %s10 = scalar_lea.sflag [#allocation3], 1
    %11 = vsyncpa %s10, 0
    %12 = vsyncpa [#allocation5], 0
    %s13 = scalar_lea.sflag [#allocation5], 1
    %14 = vsyncpa %s13, 0
    loop: start=0, step=1, limit=4
    $region2: #{tpu_custom_call.1} parent=1 // loop_pre_header
      _
    $region3: #{tpu_custom_call.1} parent=1 // loop_header
      %s16 = sphi 0, %s20
      %p17 = scmp.ge.s32.totalorder %s16, 4
      %s26 = sphi 0, %s28
      %s29 = sphi 0, %s26
      %s30 = sphi 0, %s29
      %s46 = sphi 0, %s30
      %s52 = sphi 0, %s54
      %s55 = sphi 0, %s52
      %s56 = sphi 0, %s55
      %s72 = sphi 0, %s56
      %s78 = sphi 0, %s80
      %s81 = sphi 0, %s78
      %s82 = sphi 0, %s81
      %s98 = sphi 0, %s82
      %s104 = sphi 0, %s106
      %s107 = sphi 0, %s104
      %s108 = sphi 0, %s107
      %s124 = sphi 0, %s108
    $region4: #{tpu_custom_call.1} parent=1 // loop_header_branch
      %19 = sbr.rel (%p17) target = $region8
    $region5: #{tpu_custom_call.1} parent=1 // loop_body
      %s21 = ssub.s32 %s16, 1
      %s22 = ssub.s32 %s16, 2
      %s23 = sadd.s32 %s16, 1
      %s24 = ssub.s32 %s16, %s23
      %p25 = scmp.eq.s32.totalorder %s24, 0
      %s27 = sadd.s32 %s26, 1
      %s28 = scalar_select %p25, %s26, %s27
      %p31 = pneg %p25
      %p32 = scmp.eq.s32.totalorder %s16, 1
      %p33 = por %p31, %p32
      %p34 = scmp.ne.s32.totalorder %s26, %s29
      %p35 = scmp.eq.s32.totalorder %s16, 0
      %p36 = por %p34, %p35
      %p37 = scmp.ne.s32.totalorder %s26, %s29
      %p38 = scmp.eq.s32.totalorder %s21, 1
      %p39 = por %p37, %p38
      %p40 = scmp.ne.s32.totalorder %s29, %s30
      %p41 = scmp.eq.s32.totalorder %s21, 0
      %p42 = por %p40, %p41
      %p43 = scmp.ne.s32.totalorder %s29, %s30
      %p44 = scmp.eq.s32.totalorder %s22, 1
      %p45 = por %p43, %p44
      %p47 = scmp.ne.s32.totalorder %s30, %s46
      %p48 = scmp.eq.s32.totalorder %s22, 0
      %p49 = por %p47, %p48
      %s50 = ssub.s32 %s16, %s23
      %p51 = scmp.eq.s32.totalorder %s50, 0
      %s53 = sadd.s32 %s52, 1
      %s54 = scalar_select %p51, %s52, %s53
      %p57 = pneg %p51
      %p58 = scmp.eq.s32.totalorder %s16, 1
      %p59 = por %p57, %p58
      %p60 = scmp.ne.s32.totalorder %s52, %s55
      %p61 = scmp.eq.s32.totalorder %s16, 0
      %p62 = por %p60, %p61
      %p63 = scmp.ne.s32.totalorder %s52, %s55
      %p64 = scmp.eq.s32.totalorder %s21, 1
      %p65 = por %p63, %p64
      %p66 = scmp.ne.s32.totalorder %s55, %s56
      %p67 = scmp.eq.s32.totalorder %s21, 0
      %p68 = por %p66, %p67
      %p69 = scmp.ne.s32.totalorder %s55, %s56
      %p70 = scmp.eq.s32.totalorder %s22, 1
      %p71 = por %p69, %p70
      %p73 = scmp.ne.s32.totalorder %s56, %s72
      %p74 = scmp.eq.s32.totalorder %s22, 0
      %p75 = por %p73, %p74
      %s76 = ssub.s32 %s16, %s23
      %p77 = scmp.eq.s32.totalorder %s76, 0
      %s79 = sadd.s32 %s78, 1
      %s80 = scalar_select %p77, %s78, %s79
      %p83 = pneg %p77
      %p84 = scmp.eq.s32.totalorder %s16, 1
      %p85 = por %p83, %p84
      %p86 = scmp.ne.s32.totalorder %s78, %s81
      %p87 = scmp.eq.s32.totalorder %s16, 0
      %p88 = por %p86, %p87
      %p89 = scmp.ne.s32.totalorder %s78, %s81
      %p90 = scmp.eq.s32.totalorder %s21, 1
      %p91 = por %p89, %p90
      %p92 = scmp.ne.s32.totalorder %s81, %s82
      %p93 = scmp.eq.s32.totalorder %s21, 0
      %p94 = por %p92, %p93
      %p95 = scmp.ne.s32.totalorder %s81, %s82
      %p96 = scmp.eq.s32.totalorder %s22, 1
      %p97 = por %p95, %p96
      %p99 = scmp.ne.s32.totalorder %s82, %s98
      %p100 = scmp.eq.s32.totalorder %s22, 0
      %p101 = por %p99, %p100
      %s102 = ssub.s32 %s16, %s23
      %p103 = scmp.eq.s32.totalorder %s102, 0
      %s105 = sadd.s32 %s104, 1
      %s106 = scalar_select %p103, %s104, %s105
      %p109 = pneg %p103
      %p110 = scmp.eq.s32.totalorder %s16, 1
      %p111 = por %p109, %p110
      %p112 = scmp.ne.s32.totalorder %s104, %s107
      %p113 = scmp.eq.s32.totalorder %s16, 0
      %p114 = por %p112, %p113
      %p115 = scmp.ne.s32.totalorder %s104, %s107
      %p116 = scmp.eq.s32.totalorder %s21, 1
      %p117 = por %p115, %p116
      %p118 = scmp.ne.s32.totalorder %s107, %s108
      %p119 = scmp.eq.s32.totalorder %s21, 0
      %p120 = por %p118, %p119
      %p121 = scmp.ne.s32.totalorder %s107, %s108
      %p122 = scmp.eq.s32.totalorder %s22, 1
      %p123 = por %p121, %p122
      %p125 = scmp.ne.s32.totalorder %s108, %s124
      %p126 = scmp.eq.s32.totalorder %s22, 0
      %p127 = por %p125, %p126
      %p128 = scmp.le.s32.totalorder 1, %s16
      %p129 = scmp.lt.s32.totalorder %s16, 3
      %p130 = pnand %p128, %p129
      %p131 = pneg %p130
      // Predicated region
      $region9: #{tpu_custom_call.1} parent=5 // pred_check
        _
      $region10: #{tpu_custom_call.1} parent=5 // pred_check_branch
        %133 = sbr.rel (%p130) target = $region12
      $region11: #{tpu_custom_call.1} parent=5 // pred_region
        %s134 = ssub.s32 %s16, 1
      $region12: #{tpu_custom_call.1} parent=5 // pred_fallthru
        _
      %p135 = scmp.lt.s32.totalorder %s16, 2
      // Predicated region
      $region13: #{tpu_custom_call.1} parent=5 // pred_check
        %p136 = pneg %p135
      $region14: #{tpu_custom_call.1} parent=5 // pred_check_branch
        %138 = sbr.rel (%p136) target = $region16
      $region15: #{tpu_custom_call.1} parent=5 // pred_region
        // Predicated region
        $region17: #{tpu_custom_call.1} parent=15 // pred_check
          %p139 = pneg %p36
        $region18: #{tpu_custom_call.1} parent=15 // pred_check_branch
          %141 = sbr.rel (%p139) target = $region20
        $region19: #{tpu_custom_call.1} parent=15 // pred_region
          %s142 = sand.u32 %s26, 1
          %s143 = scalar_lea.sflag [#allocation3], %s142
          %s144 = sand.u32 %s26, 1
          %s145 = smul.addr %s144, 8
          %s146 = scalar_lea.vmem [#allocation2], %s145
          %s148 = ssub.s32 128, 128
          %149 = vsyncadd %s143, %s148
          %s150 = smul.addr %s16, 128
          %s151 = scalar_lea.hbm %s0, %s150
          %s153 = sshll.u32 %s146, 4
          %s154 = int_to_ptr.vmem [resolvable:$true] %s153
          %156 = dma.hbm_to_vmem [thread:$0]  %s151, 128, %s154, %s143
        $region20: #{tpu_custom_call.1} parent=15 // pred_fallthru
          _
        // Predicated region
        $region21: #{tpu_custom_call.1} parent=15 // pred_check
          %p157 = pneg %p62
        $region22: #{tpu_custom_call.1} parent=15 // pred_check_branch
          %159 = sbr.rel (%p157) target = $region24
        $region23: #{tpu_custom_call.1} parent=15 // pred_region
          %s160 = sand.u32 %s52, 1
          %s161 = scalar_lea.sflag [#allocation5], %s160
          %s162 = sand.u32 %s52, 1
          %s163 = smul.addr %s162, 8
          %s164 = scalar_lea.vmem [#allocation4], %s163
          %s166 = ssub.s32 128, 128
          %167 = vsyncadd %s161, %s166
          %s168 = smul.addr %s16, 128
          %s169 = scalar_lea.hbm %s1, %s168
          %s171 = sshll.u32 %s164, 4
          %s172 = int_to_ptr.vmem [resolvable:$true] %s171
          %174 = dma.hbm_to_vmem [thread:$0]  %s169, 128, %s172, %s161
        $region24: #{tpu_custom_call.1} parent=15 // pred_fallthru
          _
      $region16: #{tpu_custom_call.1} parent=5 // pred_fallthru
        _
      %p175 = scmp.le.s32.totalorder 1, %s16
      %p176 = scmp.lt.s32.totalorder %s16, 3
      %p177 = pnand %p175, %p176
      %p178 = pneg %p177
      // Predicated region
      $region25: #{tpu_custom_call.1} parent=5 // pred_check
        _
      $region26: #{tpu_custom_call.1} parent=5 // pred_check_branch
        %180 = sbr.rel (%p177) target = $region28
      $region27: #{tpu_custom_call.1} parent=5 // pred_region
        %s181 = ssub.s32 %s16, 1
        %s182 = sand.u32 %s29, 1
        %s183 = scalar_lea.sflag [#allocation3], %s182
        %s184 = sand.u32 %s29, 1
        %s185 = smul.addr %s184, 8
        %s186 = scalar_lea.vmem [#allocation2], %s185
        // Predicated region
        $region29: #{tpu_custom_call.1} parent=27 // pred_check
          %p187 = pneg %p42
        $region30: #{tpu_custom_call.1} parent=27 // pred_check_branch
          %189 = sbr.rel (%p187) target = $region32
        $region31: #{tpu_custom_call.1} parent=27 // pred_region
          %190 = dma.done %s183, 128
        $region32: #{tpu_custom_call.1} parent=27 // pred_fallthru
          _
        %s191 = sand.u32 %s55, 1
        %s192 = scalar_lea.sflag [#allocation5], %s191
        %s193 = sand.u32 %s55, 1
        %s194 = smul.addr %s193, 8
        %s195 = scalar_lea.vmem [#allocation4], %s194
        // Predicated region
        $region33: #{tpu_custom_call.1} parent=27 // pred_check
          %p196 = pneg %p68
        $region34: #{tpu_custom_call.1} parent=27 // pred_check_branch
          %198 = sbr.rel (%p196) target = $region36
        $region35: #{tpu_custom_call.1} parent=27 // pred_region
          %199 = dma.done %s192, 128
        $region36: #{tpu_custom_call.1} parent=27 // pred_fallthru
          _
        %s200 = sand.u32 %s29, 1
        %s201 = scalar_lea.sflag [#allocation3], %s200
        %s202 = sand.u32 %s29, 1
        %s203 = smul.addr %s202, 8
        %s204 = scalar_lea.vmem [#allocation2], %s203
        %p205 = pneg %p42
        %p206 = pneg %p39
        %s207 = sand.u32 %s55, 1
        %s208 = scalar_lea.sflag [#allocation5], %s207
        %s209 = sand.u32 %s55, 1
        %s210 = smul.addr %s209, 8
        %s211 = scalar_lea.vmem [#allocation4], %s210
        %p212 = pneg %p68
        %p213 = pneg %p65
        %p214 = pneg %p94
        %p215 = pneg %p91
        %p216 = scmp.lt.s32.totalorder %s21, 1
        %s217 = scalar_select %p216, %s21, 1
        %s218 = smul.addr %s217, 8
        %s219 = scalar_lea.vmem %s2, %s218
        %p220 = pneg %p120
        %p221 = pneg %p117
        %p222 = scmp.lt.s32.totalorder %s21, 1
        %s223 = scalar_select %p222, %s21, 1
        %s224 = smul.addr %s223, 8
        %s225 = scalar_lea.vmem %s3, %s224
        %p226 = scmp.lt.s32.totalorder %s21, 1
        %s227 = scalar_select %p226, %s21, 1
        %s228 = smul.addr %s227, 8
        %s229 = scalar_lea.vmem %s2, %s228
        %p230 = scmp.lt.s32.totalorder %s21, 1
        %s231 = scalar_select %p230, %s21, 1
        %s232 = smul.addr %s231, 8
        %s233 = scalar_lea.vmem %s3, %s232
        %v234 = vld [vmem:[%s186] sm:$0xff]
        %v235 = vld [vmem:[%s195] sm:$0xff]
        %v236 = vmul.f32 %v234, %v235
        %237 = vadd.xlane.f32.xlu0 %v236
        %v238 = vpop.xlane.xlu0 %237
        %vm239 = vcmask 7168
        %240 = vst.msk [vmem:[%s229] sm:$0xff] %vm239, %v238
        %v241 = vld [vmem:[%s186] sm:$0xff]
        %242 = vadd.xlane.f32.xlu0 %v241
        %v243 = vpop.xlane.xlu0 %242
        %v244 = vld [vmem:[%s195] sm:$0xff]
        %245 = vadd.xlane.f32.xlu0 %v244
        %v246 = vpop.xlane.xlu0 %245
        %v247 = vadd.f32 %v243, %v246
        %248 = vst.msk [vmem:[%s233] sm:$0xff] %vm239, %v247
        %p249 = scmp.lt.s32.totalorder %s21, 1
        %s250 = scalar_select %p249, %s21, 1
        %s251 = smul.addr %s250, 8
        %s252 = scalar_lea.vmem %s2, %s251
        %p253 = scmp.lt.s32.totalorder %s21, 1
        %s254 = scalar_select %p253, %s21, 1
        %s255 = smul.addr %s254, 8
        %s256 = scalar_lea.vmem %s3, %s255
        // Predicated region
        $region37: #{tpu_custom_call.1} parent=27 // pred_check
          %p257 = pneg %p91
        $region38: #{tpu_custom_call.1} parent=27 // pred_check_branch
          %259 = sbr.rel (%p257) target = $region40
        $region39: #{tpu_custom_call.1} parent=27 // pred_region
          _
        $region40: #{tpu_custom_call.1} parent=27 // pred_fallthru
          _
        // Predicated region
        $region41: #{tpu_custom_call.1} parent=27 // pred_check
          %p260 = pneg %p117
        $region42: #{tpu_custom_call.1} parent=27 // pred_check_branch
          %262 = sbr.rel (%p260) target = $region44
        $region43: #{tpu_custom_call.1} parent=27 // pred_region
          _
        $region44: #{tpu_custom_call.1} parent=27 // pred_fallthru
          _
      $region28: #{tpu_custom_call.1} parent=5 // pred_fallthru
        _
      %p263 = scmp.le.s32.totalorder 2, %s16
      // Predicated region
      $region45: #{tpu_custom_call.1} parent=5 // pred_check
        %p264 = pneg %p263
      $region46: #{tpu_custom_call.1} parent=5 // pred_check_branch
        %266 = sbr.rel (%p264) target = $region48
      $region47: #{tpu_custom_call.1} parent=5 // pred_region
        %s267 = ssub.s32 %s16, 2
        // Predicated region
        $region49: #{tpu_custom_call.1} parent=47 // pred_check
          %p268 = pneg %p97
        $region50: #{tpu_custom_call.1} parent=47 // pred_check_branch
          %270 = sbr.rel (%p268) target = $region52
        $region51: #{tpu_custom_call.1} parent=47 // pred_region
          %p271 = scmp.lt.s32.totalorder %s22, 1
          %s272 = scalar_select %p271, %s22, 1
          %s273 = smul.addr %s272, 8
          %s274 = scalar_lea.vmem %s2, %s273
        $region52: #{tpu_custom_call.1} parent=47 // pred_fallthru
          _
        // Predicated region
        $region53: #{tpu_custom_call.1} parent=47 // pred_check
          %p275 = pneg %p123
        $region54: #{tpu_custom_call.1} parent=47 // pred_check_branch
          %277 = sbr.rel (%p275) target = $region56
        $region55: #{tpu_custom_call.1} parent=47 // pred_region
          %p278 = scmp.lt.s32.totalorder %s22, 1
          %s279 = scalar_select %p278, %s22, 1
          %s280 = smul.addr %s279, 8
          %s281 = scalar_lea.vmem %s3, %s280
        $region56: #{tpu_custom_call.1} parent=47 // pred_fallthru
          _
      $region48: #{tpu_custom_call.1} parent=5 // pred_fallthru
        _
    $region6: #{tpu_custom_call.1} parent=1 // loop_footer
      %s20 = sadd.s32 1, %s16
    $region7: #{tpu_custom_call.1} parent=1 // loop_footer_branch
      %15 = sbr.rel target = $region3
    $region8: #{tpu_custom_call.1} parent=1 // loop_exit
      _
    %282 = vsyncpa [#allocation3], 1
    %s283 = scalar_lea.sflag [#allocation3], 1
    %284 = vsyncpa %s283, 1
    %285 = vsyncpa [#allocation5], 1
    %s286 = scalar_lea.sflag [#allocation5], 1
    %287 = vsyncpa %s286, 1

</llo_original>
